<compile_context>
chip_gen: v7x
topology: tpu7x:2x2x1
jax: 0.10.0
libtpu: 0.0.40
codegen_flags: <defaults>
</compile_context>

<pallas_src>
import functools

import jax
import jax.numpy as jnp
from jax import lax
from jax.experimental import pallas as pl
from jax.experimental.pallas import tpu as pltpu

LOG_STD_MIN = -20.0
LOG_STD_MAX = 2.0

LANE = 128            # TPU lane width: hidden is padded up to this
DEFAULT_TILE_B = 2048  # batch rows per grid step


def actor_mean_kernel(s_ref, w1_ref, w2_ref, w3t_ref, mean_t_ref, *, bf16_tanh):
    """One batch tile: mean^T = W3^T @ tanh(tanh(s @ W1) @ W2)^T.

    All matmuls run on the MXU in the weights' dtype (bf16) with f32
    accumulation.  The output tile is (a_dim, tile_b): lane axis = batch,
    fully dense stores.
    """
    w_dtype = w1_ref.dtype
    s = s_ref[...].astype(w_dtype)              # in-kernel cast (free under MXU slack)

    z1 = jnp.dot(s, w1_ref[...], preferred_element_type=jnp.float32)
    h1 = jnp.tanh(z1.astype(w_dtype)) if bf16_tanh else jnp.tanh(z1).astype(w_dtype)

    z2 = jnp.dot(h1, w2_ref[...], preferred_element_type=jnp.float32)
    h2 = jnp.tanh(z2.astype(w_dtype)) if bf16_tanh else jnp.tanh(z2).astype(w_dtype)

    # mean^T = w3^T @ h2^T  (contract hidden on both operands; N-T matmul).
    mean_t = lax.dot_general(
        w3t_ref[...], h2,
        dimension_numbers=(((1,), (1,)), ((), ())),
        preferred_element_type=jnp.float32)
    mean_t_ref[...] = mean_t.astype(mean_t_ref.dtype)


def _pad_to(x, rows, cols):
    r, c = x.shape
    return jnp.pad(x, ((0, rows - r), (0, cols - c)))


def prepare_actor_params(w1, w2, w3, compute_dtype=jnp.bfloat16):
    """One-time parameter prep (call ONCE, outside the per-step path).

    w1: (s_dim, hidden), w2: (hidden, hidden), w3: (hidden, a_dim).
    Returns (w1p, w2p, w3t) with hidden zero-padded to a 128-lane multiple,
    cast to `compute_dtype`, and w3 transposed to (a_dim, hidden_padded).
    """
    s_dim, hidden = w1.shape
    a_dim = w3.shape[1]
    hid_p = max(LANE, ((hidden + LANE - 1) // LANE) * LANE)
    w1p = _pad_to(w1, s_dim, hid_p).astype(compute_dtype)
    w2p = _pad_to(w2, hid_p, hid_p).astype(compute_dtype)
    w3t = _pad_to(w3, hid_p, a_dim).T.astype(compute_dtype)   # (a_dim, hid_p)
    return w1p, w2p, w3t


def _supports_bf16_eup():
    """bf16 tanh path only on v6e / v7x (v5e and older have no bf16 EUP)."""
    try:
        kind = jax.devices()[0].device_kind.lower()
    except Exception:
        return False
    return any(tag in kind for tag in ("v6", "v7", "7x"))


def _choose_tile_b(batch, tile_b):
    """Batch tile: lane-aligned, capped so v7x's two TCs both get >= 1 step."""
    if batch <= LANE:
        return batch                     # single tile, block == full batch
    tb = min(tile_b, batch)
    if batch >= 2 * LANE:
        # at least 2 grid steps (megacore sharding on v7x)
        half = -(-((batch + 1) // 2) // LANE) * LANE
        tb = min(tb, half)
    if tb < batch:
        tb = max(LANE, (tb // LANE) * LANE)   # lane-aligned tiles
    return tb


@functools.partial(jax.jit, static_argnames=("tile_b", "bf16_tanh"))
def actor_forward(s, w1p, w2p, w3t, log_std, *, tile_b=DEFAULT_TILE_B,
                  bf16_tanh=False):
    """SAC Actor forward.

    s: (B, s_dim) float32; w1p/w2p/w3t from `prepare_actor_params`;
    log_std: (a_dim,).  Returns (mean, std), both (B, a_dim) in s.dtype.
    """
    B, s_dim = s.shape
    a_dim, hid_p = w3t.shape
    out_dtype = s.dtype

    tb = _choose_tile_b(B, tile_b)
    grid = (pl.cdiv(B, tb),)

    kernel = functools.partial(actor_mean_kernel, bf16_tanh=bf16_tanh)

    # NOTE on the partial last tile (B % tb != 0): the out-of-range input rows
    # contain undefined data; this is benign only because batch rows are fully
    # independent and Pallas discards out-of-range output columns.  A future
    # refactor that reduces over the batch axis must mask those rows.
    mean_t = pl.pallas_call(
        kernel,
        out_shape=jax.ShapeDtypeStruct((a_dim, B), out_dtype),   # transposed, lane-dense
        grid=grid,
        in_specs=[
            pl.BlockSpec((tb, s_dim), lambda i: (i, 0)),      # batch-tiled state (f32)
            pl.BlockSpec((s_dim, hid_p), lambda i: (0, 0)),   # weights pinned in VMEM
            pl.BlockSpec((hid_p, hid_p), lambda i: (0, 0)),
            pl.BlockSpec((a_dim, hid_p), lambda i: (0, 0)),
        ],
        out_specs=pl.BlockSpec((a_dim, tb), lambda i: (0, i)),   # lane axis = batch
        compiler_params=pltpu.CompilerParams(
            dimension_semantics=("parallel",),       # shard batch tiles across TCs (v7x)
            vmem_limit_bytes=32 * 1024 * 1024,       # covers v5e's 16 MiB scoped default
        ),
    )(s, w1p, w2p, w3t)

    mean = mean_t.T   # (B, a_dim); touches only useful output bytes

    # std is batch-independent: one exp(clip(.)) row.  The broadcast below is
    # only materialized because the module's interface returns a (B, a_dim)
    # std; consumers that accept the row avoid that HBM write entirely.
    std_row = jnp.exp(jnp.clip(log_std.astype(jnp.float32), LOG_STD_MIN, LOG_STD_MAX))
    std = jnp.broadcast_to(std_row.astype(out_dtype)[None, :], mean.shape)
    return mean, std


def init_actor_params(key, s_dim, a_dim, hidden):
    """Deterministic synthetic init (mirrors PyTorch Linear shapes, stored (in, out))."""
    k1, k2, k3 = jax.random.split(key, 3)
    w1 = jax.random.normal(k1, (s_dim, hidden), jnp.float32) * 0.1
    w2 = jax.random.normal(k2, (hidden, hidden), jnp.float32) * 0.1
    w3 = jax.random.normal(k3, (hidden, a_dim), jnp.float32) * 0.1
    log_std = jnp.ones((a_dim,), jnp.float32)   # matches torch.ones([a_dim])
    return w1, w2, w3, log_std


def _ref_forward(s, w1, w2, w3, log_std, compute_dtype=jnp.bfloat16, bf16_tanh=False):
    """Plain-JAX reference mirroring the kernel's bf16 / f32-accumulate recipe."""
    cd = compute_dtype
    z1 = jnp.dot(s.astype(cd), w1.astype(cd), preferred_element_type=jnp.float32)
    h1 = jnp.tanh(z1.astype(cd)) if bf16_tanh else jnp.tanh(z1).astype(cd)
    z2 = jnp.dot(h1, w2.astype(cd), preferred_element_type=jnp.float32)
    h2 = jnp.tanh(z2.astype(cd)) if bf16_tanh else jnp.tanh(z2).astype(cd)
    mean = jnp.dot(h2, w3.astype(cd), preferred_element_type=jnp.float32).astype(s.dtype)
    std_row = jnp.exp(jnp.clip(log_std, LOG_STD_MIN, LOG_STD_MAX))
    std = jnp.broadcast_to(std_row[None, :], mean.shape).astype(s.dtype)
    return mean, std


if __name__ == "__main__":
    B, S_DIM, A_DIM, HIDDEN = 2, 8, 4, 32

    key = jax.random.PRNGKey(0)
    k_s, k_p, k_s2 = jax.random.split(key, 3)
    s = jax.random.normal(k_s, (B, S_DIM), jnp.float32)
    w1, w2, w3, log_std = init_actor_params(k_p, S_DIM, A_DIM, HIDDEN)

    # One-time parameter prep (hoisted out of the per-call path).
    w1p, w2p, w3t = prepare_actor_params(w1, w2, w3)
    bf16_tanh = _supports_bf16_eup()

    # --- small-batch case (single tile) ---
    mean, std = actor_forward(s, w1p, w2p, w3t, log_std, bf16_tanh=bf16_tanh)
    jax.block_until_ready((mean, std))
    assert mean.shape == (B, A_DIM) and std.shape == (B, A_DIM)

    mean_r, std_r = _ref_forward(s, w1, w2, w3, log_std, bf16_tanh=bf16_tanh)
    assert jnp.allclose(mean, mean_r, atol=1e-2, rtol=1e-2), "mean mismatch (bf16 ref)"
    assert jnp.allclose(std, std_r, atol=1e-6, rtol=1e-6), "std mismatch"

    # Sanity check against pure-f32 PyTorch semantics (loose tol for bf16 MXU).
    mean_f = jnp.tanh(jnp.tanh(s @ w1) @ w2) @ w3
    assert jnp.allclose(mean, mean_f, atol=3e-2, rtol=3e-2), "mean mismatch (f32 ref)"

    # --- multi-tile case (exercises lane-aligned tiles + partial last tile) ---
    B2 = 200
    s2 = jax.random.normal(k_s2, (B2, S_DIM), jnp.float32)
    mean2, std2 = actor_forward(s2, w1p, w2p, w3t, log_std,
                                tile_b=128, bf16_tanh=bf16_tanh)
    jax.block_until_ready((mean2, std2))
    mean2_r, std2_r = _ref_forward(s2, w1, w2, w3, log_std, bf16_tanh=bf16_tanh)
    assert mean2.shape == (B2, A_DIM) and std2.shape == (B2, A_DIM)
    assert jnp.allclose(mean2, mean2_r, atol=1e-2, rtol=1e-2), "mean mismatch (tiled)"
    assert jnp.allclose(std2, std2_r, atol=1e-6, rtol=1e-6), "std mismatch (tiled)"

    print("KERNEL_OK")
</pallas_src>

<mosaic_0001>
module attributes {stable_mosaic.version = 11 : i64} {
  func.func @actor_mean_kernel(%arg0: i32, %arg1: memref<2x8xf32, #tpu.memory_space<vmem>>, %arg2: memref<8x128xbf16, #tpu.memory_space<vmem>>, %arg3: memref<128x128xbf16, #tpu.memory_space<vmem>>, %arg4: memref<4x128xbf16, #tpu.memory_space<vmem>>, %arg5: memref<4x2xf32, #tpu.memory_space<vmem>>) attributes {dimension_semantics = [#tpu.dimension_semantics<parallel>], iteration_bounds = array<i64: 1>, scalar_prefetch = 0 : i64, scratch_operands = 0 : i64, tpu.core_type = #tpu.core_type<tc>, window_params = [{transform_indices = @transform_0, window_bounds = array<i64: 2, 8>}, {pipeline_mode = #tpu.pipeline_mode<synchronous>, transform_indices = @transform_1, window_bounds = array<i64: 8, 128>}, {pipeline_mode = #tpu.pipeline_mode<synchronous>, transform_indices = @transform_2, window_bounds = array<i64: 128, 128>}, {pipeline_mode = #tpu.pipeline_mode<synchronous>, transform_indices = @transform_3, window_bounds = array<i64: 4, 128>}, {transform_indices = @transform_4, window_bounds = array<i64: 4, 2>}]} {
    %c0 = arith.constant 0 : index
    %c0_0 = arith.constant 0 : index
    %0 = vector.load %arg1[%c0, %c0_0] : memref<2x8xf32, #tpu.memory_space<vmem>>, vector<2x8xf32>
    %1 = arith.truncf %0 : vector<2x8xf32> to vector<2x8xbf16>
    %c0_1 = arith.constant 0 : index
    %c0_2 = arith.constant 0 : index
    %2 = vector.load %arg2[%c0_1, %c0_2] : memref<8x128xbf16, #tpu.memory_space<vmem>>, vector<8x128xbf16>
    %cst = arith.constant dense<0.000000e+00> : vector<2x128xf32>
    %3 = tpu.matmul %1, %2, %cst {dimension_numbers = #tpu.dot_dimension_numbers<[1], [0], [0], [1], [0, 0, 1, 1], [], []>} : vector<2x8xbf16>, vector<8x128xbf16>, vector<2x128xf32> -> vector<2x128xf32>
    %4 = math.tanh %3 : vector<2x128xf32>
    %5 = arith.truncf %4 : vector<2x128xf32> to vector<2x128xbf16>
    %c0_3 = arith.constant 0 : index
    %c0_4 = arith.constant 0 : index
    %6 = vector.load %arg3[%c0_3, %c0_4] : memref<128x128xbf16, #tpu.memory_space<vmem>>, vector<128x128xbf16>
    %cst_5 = arith.constant dense<0.000000e+00> : vector<2x128xf32>
    %7 = tpu.matmul %5, %6, %cst_5 {dimension_numbers = #tpu.dot_dimension_numbers<[1], [0], [0], [1], [0, 0, 1, 1], [], []>} : vector<2x128xbf16>, vector<128x128xbf16>, vector<2x128xf32> -> vector<2x128xf32>
    %8 = math.tanh %7 : vector<2x128xf32>
    %9 = arith.truncf %8 : vector<2x128xf32> to vector<2x128xbf16>
    %c0_6 = arith.constant 0 : index
    %c0_7 = arith.constant 0 : index
    %10 = vector.load %arg4[%c0_6, %c0_7] : memref<4x128xbf16, #tpu.memory_space<vmem>>, vector<4x128xbf16>
    %cst_8 = arith.constant dense<0.000000e+00> : vector<4x2xf32>
    %11 = tpu.matmul %10, %9, %cst_8 {dimension_numbers = #tpu.dot_dimension_numbers<[1], [1], [0], [0], [0, 0, 1, 0], [], []>} : vector<4x128xbf16>, vector<2x128xbf16>, vector<4x2xf32> -> vector<4x2xf32>
    %c0_9 = arith.constant 0 : index
    %c0_10 = arith.constant 0 : index
    %12 = vector.load %arg5[%c0_9, %c0_10] : memref<4x2xf32, #tpu.memory_space<vmem>>, vector<4x2xf32>
    tpu.vector_store %arg5[%c0_9, %c0_10], %11 {strides = array<i32>} : memref<4x2xf32, #tpu.memory_space<vmem>>, vector<4x2xf32>,
    return
  }
  func.func @transform_0(%arg0: i32) -> (i32, i32) {
    %c0_i32 = arith.constant 0 : i32
    %c0_i32_0 = arith.constant 0 : i32
    return %arg0, %c0_i32 : i32, i32
  }
  func.func @transform_1(%arg0: i32) -> (i32, i32) {
    %c0_i32 = arith.constant 0 : i32
    %c0_i32_0 = arith.constant 0 : i32
    %c0_i32_1 = arith.constant 0 : i32
    return %c0_i32, %c0_i32_0 : i32, i32
  }
  func.func @transform_2(%arg0: i32) -> (i32, i32) {
    %c0_i32 = arith.constant 0 : i32
    %c0_i32_0 = arith.constant 0 : i32
    %c0_i32_1 = arith.constant 0 : i32
    return %c0_i32, %c0_i32_0 : i32, i32
  }
  func.func @transform_3(%arg0: i32) -> (i32, i32) {
    %c0_i32 = arith.constant 0 : i32
    %c0_i32_0 = arith.constant 0 : i32
    %c0_i32_1 = arith.constant 0 : i32
    return %c0_i32, %c0_i32_0 : i32, i32
  }
  func.func @transform_4(%arg0: i32) -> (i32, i32) {
    %c0_i32 = arith.constant 0 : i32
    %c0_i32_0 = arith.constant 0 : i32
    return %c0_i32, %arg0 : i32, i32
  }
}

</mosaic_0001>

<llo_original>
// kernel: actor_forward.1
$region0: #{actor_forward.1}
  #allocation0 [shape = 'u32[]', space=smem, size = 0x4, offset = 0x4, fixed_abs, tag = 'smem constant byte address 0x4 - core index']
  #allocation1 [shape = 'u32[144,128]{1,0:T(1,128)}', space=vmem, size = 0x12000, scoped, tag = 'internal scratch']
  %s0 = inlined_call_operand.vmem [shape: f32[2,8], index: 0, kind: input, shape index: {}]
  %s1 = inlined_call_operand.vmem [shape: bf16[8,128], index: 1, kind: input, shape index: {}]
  %s2 = inlined_call_operand.hbm [shape: bf16[128,128], index: 2, kind: input, shape index: {}]
  %s3 = inlined_call_operand.hbm [shape: bf16[4,128], index: 3, kind: input, shape index: {}]
  %s4 = inlined_call_operand.vmem [shape: f32[4,2], index: 4, kind: output, shape index: {}]
  %s5 = sld [smem:[#allocation0]]
  $region34: #{actor_forward.1} parent=0
    _
  %s7 = ssub.s32 1, %s5
  %s8 = scalar_select 0, %s7, %s5
  $region1: #{actor_forward.1} parent=0
    #allocation2 [shape = 'u8[32768]{0}', space=vmem, size = 0x8000, scoped, tag = 'input window, operand 2, single buffered']
    #allocation3 [shape = 's32[1]{0}', space=sflag, size = 0x4, scoped, tag = 'scoped memory for actor_forward.1']
    #allocation4 [shape = 'u8[1024]{0}', space=vmem, size = 0x400, scoped, tag = 'input window, operand 3, single buffered']
    #allocation5 [shape = 's32[1]{0}', space=sflag, size = 0x4, scoped, tag = 'scoped memory for actor_forward.1']
    %9 = vsyncpa [#allocation3], 0
    %10 = vsyncpa [#allocation5], 0
    // Predicated region
    $region2: #{actor_forward.1} parent=1 // pred_check
      _
    $region3: #{actor_forward.1} parent=1 // pred_check_branch
      %12 = sbr.rel (0) target = $region5
    $region4: #{actor_forward.1} parent=1 // pred_region
      _
    $region5: #{actor_forward.1} parent=1 // pred_fallthru
      _
    // Predicated region
    $region6: #{actor_forward.1} parent=1 // pred_check
      _
    $region7: #{actor_forward.1} parent=1 // pred_check_branch
      %14 = sbr.rel (0) target = $region9
    $region8: #{actor_forward.1} parent=1 // pred_region
      _
    $region9: #{actor_forward.1} parent=1 // pred_fallthru
      _
    // Predicated region
    $region10: #{actor_forward.1} parent=1 // pred_check
      _
    $region11: #{actor_forward.1} parent=1 // pred_check_branch
      %16 = sbr.rel (0) target = $region13
    $region12: #{actor_forward.1} parent=1 // pred_region
      %s18 = ssub.s32 1024, 1024
      %19 = vsyncadd [#allocation3], %s18
      %s20 = sshll.u32 [#allocation2], 4
      %s21 = int_to_ptr.vmem [resolvable:$true] %s20
      %26 = dma.hbm_to_vmem [thread:$0]  %s2, 1024, %s21, [#allocation3], 64, 64, 4
    $region13: #{actor_forward.1} parent=1 // pred_fallthru
      _
    // Predicated region
    $region14: #{actor_forward.1} parent=1 // pred_check
      _
    $region15: #{actor_forward.1} parent=1 // pred_check_branch
      %28 = sbr.rel (0) target = $region17
    $region16: #{actor_forward.1} parent=1 // pred_region
      %s30 = ssub.s32 32, 32
      %31 = vsyncadd [#allocation5], %s30
      %s33 = sshll.u32 [#allocation4], 4
      %s34 = int_to_ptr.vmem [resolvable:$true] %s33
      %36 = dma.hbm_to_vmem [thread:$0]  %s3, 32, %s34, [#allocation5]
    $region17: #{actor_forward.1} parent=1 // pred_fallthru
      _
    // Predicated region
    $region18: #{actor_forward.1} parent=1 // pred_check
      _
    $region19: #{actor_forward.1} parent=1 // pred_check_branch
      %38 = sbr.rel (0) target = $region21
    $region20: #{actor_forward.1} parent=1 // pred_region
      %39 = dma.done [#allocation3], 1024
    $region21: #{actor_forward.1} parent=1 // pred_fallthru
      _
    // Predicated region
    $region22: #{actor_forward.1} parent=1 // pred_check
      _
    $region23: #{actor_forward.1} parent=1 // pred_check_branch
      %41 = sbr.rel (0) target = $region25
    $region24: #{actor_forward.1} parent=1 // pred_region
      %42 = dma.done [#allocation5], 32
    $region25: #{actor_forward.1} parent=1 // pred_fallthru
      _
    %v44 = vld [vmem:[%s0] sm:$0x3]
    %v45 = vpack.c.bf16 %v44, %v44
    %v46 = vld [vmem:[%s1] sm:$0xf]
    %vm47 = vcmask 64512
    %v49 = vsel %vm47, %v45, 0
    %vm51 = vcmask 1043456
    %v53 = vsel %vm51, %v46, 0
    %55 = vmatprep.subr.bf16.mxu0 0
    %56 = vmatpush1.bf16.msra.mxu0 %v53
    %57 = vmatprep.subr.bf16.mxu0 0
    %58 = vmatpush1.bf16.msra.mxu0 0
    %59 = vmatprep.subr.bf16.mxu0 0
    %60 = vmatpush1.bf16.msra.mxu0 0
    %61 = vmatprep.subr.bf16.mxu0 0
    %62 = vmatpush1.bf16.msra.mxu0 0
    %63 = vmatprep.subr.bf16.mxu0 0
    %64 = vmatpush1.bf16.msra.mxu0 0
    %65 = vmatprep.subr.bf16.mxu0 0
    %66 = vmatpush1.bf16.msra.mxu0 0
    %67 = vmatprep.subr.bf16.mxu0 0
    %68 = vmatpush1.bf16.msra.mxu0 0
    %69 = vmatprep.subr.bf16.mxu0 0
    %70 = vmatpush1.bf16.msra.mxu0 0
    %71 = vmatprep.subr.bf16.mxu0 0
    %72 = vmatpush1.bf16.msra.mxu0 0
    %73 = vmatprep.subr.bf16.mxu0 0
    %74 = vmatpush1.bf16.msra.mxu0 0
    %75 = vmatprep.subr.bf16.mxu0 0
    %76 = vmatpush1.bf16.msra.mxu0 0
    %77 = vmatprep.subr.bf16.mxu0 0
    %78 = vmatpush1.bf16.msra.mxu0 0
    %79 = vmatprep.subr.bf16.mxu0 0
    %80 = vmatpush1.bf16.msra.mxu0 0
    %81 = vmatprep.subr.bf16.mxu0 0
    %82 = vmatpush1.bf16.msra.mxu0 0
    %83 = vmatprep.subr.bf16.mxu0 0
    %84 = vmatpush1.bf16.msra.mxu0 0
    %85 = vmatprep.subr.bf16.mxu0 0
    %86 = vmatpush1.bf16.msra.mxu0 0
    %87 = vmatprep.mubr.bf16.mxu0 0
    %88 = vmatmul.mubr.bf16.gmra.mrb[0].mxu0 %v49
    %v89 = vpop.f32.mrb[0].mxu0
    %v90 = vadd.f32 0.0, %v89
    %v91 = vpop.f32.mrb[0].mxu0
    %v92 = vpop.f32.mrb[0].mxu0
    %v93 = vpop.f32.mrb[0].mxu0
    %94 = vdwg.mxu0
    %v95 = vtanh.pop %v90
    %v96 = vpack.c.bf16 %v95, %v95
    %v97 = vld [vmem:[#allocation2] sm:$0xf]
    %v98 = vld [vmem:[#allocation2 + $0x4] sm:$0xf]
    %v99 = vld [vmem:[#allocation2 + $0x8] sm:$0xf]
    %v100 = vld [vmem:[#allocation2 + $0xc] sm:$0xf]
    %v101 = vld [vmem:[#allocation2 + $0x10] sm:$0xf]
    %v102 = vld [vmem:[#allocation2 + $0x14] sm:$0xf]
    %v103 = vld [vmem:[#allocation2 + $0x18] sm:$0xf]
    %v104 = vld [vmem:[#allocation2 + $0x1c] sm:$0xf]
    %v105 = vld [vmem:[#allocation2 + $0x20] sm:$0xf]
    %v106 = vld [vmem:[#allocation2 + $0x24] sm:$0xf]
    %v107 = vld [vmem:[#allocation2 + $0x28] sm:$0xf]
    %v108 = vld [vmem:[#allocation2 + $0x2c] sm:$0xf]
    %v109 = vld [vmem:[#allocation2 + $0x30] sm:$0xf]
    %v110 = vld [vmem:[#allocation2 + $0x34] sm:$0xf]
    %v111 = vld [vmem:[#allocation2 + $0x38] sm:$0xf]
    %v112 = vld [vmem:[#allocation2 + $0x3c] sm:$0xf]
    %v129 = vunpack.c.l.b16 %v97
    %v130 = vunpack.c.l.b16 %v98
    %v131 = vunpack.c.l.b16 %v99
    %v132 = vunpack.c.l.b16 %v100
    %v133 = vunpack.c.l.b16 %v101
    %v134 = vunpack.c.l.b16 %v102
    %v135 = vunpack.c.l.b16 %v103
    %v136 = vunpack.c.l.b16 %v104
    %v137 = vunpack.c.l.b16 %v105
    %v138 = vunpack.c.l.b16 %v106
    %v139 = vunpack.c.l.b16 %v107
    %v140 = vunpack.c.l.b16 %v108
    %v141 = vunpack.c.l.b16 %v109
    %v142 = vunpack.c.l.b16 %v110
    %v143 = vunpack.c.l.b16 %v111
    %v144 = vunpack.c.l.b16 %v112
    %v145 = vpack.c.b16 %v130, %v129
    %v146 = vpack.c.b16 %v132, %v131
    %v147 = vpack.c.b16 %v134, %v133
    %v148 = vpack.c.b16 %v136, %v135
    %v149 = vpack.c.b16 %v138, %v137
    %v150 = vpack.c.b16 %v140, %v139
    %v151 = vpack.c.b16 %v142, %v141
    %v152 = vpack.c.b16 %v144, %v143
    %161 = vmatprep.subr.bf16.mxu0 0
    %162 = vmatpush1.bf16.msra.mxu0 %v145
    %163 = vmatprep.subr.bf16.mxu0 0
    %164 = vmatpush1.bf16.msra.mxu0 %v146
    %165 = vmatprep.subr.bf16.mxu0 0
    %166 = vmatpush1.bf16.msra.mxu0 %v147
    %167 = vmatprep.subr.bf16.mxu0 0
    %168 = vmatpush1.bf16.msra.mxu0 %v148
    %169 = vmatprep.subr.bf16.mxu0 0
    %170 = vmatpush1.bf16.msra.mxu0 %v149
    %171 = vmatprep.subr.bf16.mxu0 0
    %172 = vmatpush1.bf16.msra.mxu0 %v150
    %173 = vmatprep.subr.bf16.mxu0 0
    %174 = vmatpush1.bf16.msra.mxu0 %v151
    %175 = vmatprep.subr.bf16.mxu0 0
    %176 = vmatpush1.bf16.msra.mxu0 %v152
    %177 = vmatprep.subr.bf16.mxu0 0
    %178 = vmatpush1.bf16.msra.mxu0 0
    %179 = vmatprep.subr.bf16.mxu0 0
    %180 = vmatpush1.bf16.msra.mxu0 0
    %181 = vmatprep.subr.bf16.mxu0 0
    %182 = vmatpush1.bf16.msra.mxu0 0
    %183 = vmatprep.subr.bf16.mxu0 0
    %184 = vmatpush1.bf16.msra.mxu0 0
    %185 = vmatprep.subr.bf16.mxu0 0
    %186 = vmatpush1.bf16.msra.mxu0 0
    %187 = vmatprep.subr.bf16.mxu0 0
    %188 = vmatpush1.bf16.msra.mxu0 0
    %189 = vmatprep.subr.bf16.mxu0 0
    %190 = vmatpush1.bf16.msra.mxu0 0
    %191 = vmatprep.subr.bf16.mxu0 0
    %192 = vmatpush1.bf16.msra.mxu0 0
    %193 = vmatprep.mubr.bf16.mxu0 0
    %194 = vmatmul.mubr.bf16.gmra.mrb[0].mxu0 %v96
    %v195 = vpop.f32.mrb[0].mxu0
    %v196 = vadd.f32 0.0, %v195
    %v197 = vpop.f32.mrb[0].mxu0
    %v198 = vpop.f32.mrb[0].mxu0
    %v199 = vpop.f32.mrb[0].mxu0
    %200 = vdwg.mxu0
    %v201 = vtanh.pop %v196
    %v202 = vpack.c.bf16 %v201, %v201
    %v203 = vld [vmem:[#allocation4] sm:$0x3]
    %204 = vmatprep.subr.bf16.mxu0 0
    %205 = vmatpush1.bf16.xpose.msra.mxu0 %v202
    %206 = vmatprep.subr.bf16.mxu0 0
    %207 = vmatpush1.bf16.xpose.msra.mxu0 0
    %208 = vmatprep.subr.bf16.mxu0 0
    %209 = vmatpush1.bf16.xpose.msra.mxu0 0
    %210 = vmatprep.subr.bf16.mxu0 0
    %211 = vmatpush1.bf16.xpose.msra.mxu0 0
    %212 = vmatprep.subr.bf16.mxu0 0
    %213 = vmatpush1.bf16.xpose.msra.mxu0 0
    %214 = vmatprep.subr.bf16.mxu0 0
    %215 = vmatpush1.bf16.xpose.msra.mxu0 0
    %216 = vmatprep.subr.bf16.mxu0 0
    %217 = vmatpush1.bf16.xpose.msra.mxu0 0
    %218 = vmatprep.subr.bf16.mxu0 0
    %219 = vmatpush1.bf16.xpose.msra.mxu0 0
    %220 = vmatprep.subr.bf16.mxu0 0
    %221 = vmatpush1.bf16.xpose.msra.mxu0 0
    %222 = vmatprep.subr.bf16.mxu0 0
    %223 = vmatpush1.bf16.xpose.msra.mxu0 0
    %224 = vmatprep.subr.bf16.mxu0 0
    %225 = vmatpush1.bf16.xpose.msra.mxu0 0
    %226 = vmatprep.subr.bf16.mxu0 0
    %227 = vmatpush1.bf16.xpose.msra.mxu0 0
    %228 = vmatprep.subr.bf16.mxu0 0
    %229 = vmatpush1.bf16.xpose.msra.mxu0 0
    %230 = vmatprep.subr.bf16.mxu0 0
    %231 = vmatpush1.bf16.xpose.msra.mxu0 0
    %232 = vmatprep.subr.bf16.mxu0 0
    %233 = vmatpush1.bf16.xpose.msra.mxu0 0
    %234 = vmatprep.subr.bf16.mxu0 0
    %235 = vmatpush1.bf16.xpose.msra.mxu0 0
    %236 = vmatprep.mubr.bf16.mxu0 0
    %237 = vmatmul.mubr.bf16.gmra.mrb[0].mxu0 %v203
    %v238 = vpop.f32.mrb[0].mxu0
    %v239 = vadd.f32 0.0, %v238
    %v240 = vpop.f32.mrb[0].mxu0
    %v241 = vpop.f32.mrb[0].mxu0
    %v242 = vpop.f32.mrb[0].mxu0
    %243 = vdwg.mxu0
    %vm244 = vcmask 11264
    %245 = vst.msk [vmem:[%s4] sm:$0xf] %vm244, %v239
    // Predicated region
    $region26: #{actor_forward.1} parent=1 // pred_check
      _
    $region27: #{actor_forward.1} parent=1 // pred_check_branch
      %247 = sbr.rel (0) target = $region29
    $region28: #{actor_forward.1} parent=1 // pred_region
      _
    $region29: #{actor_forward.1} parent=1 // pred_fallthru
      _
    // Predicated region
    $region30: #{actor_forward.1} parent=1 // pred_check
      _
    $region31: #{actor_forward.1} parent=1 // pred_check_branch
      %249 = sbr.rel (0) target = $region33
    $region32: #{actor_forward.1} parent=1 // pred_region
      _
    $region33: #{actor_forward.1} parent=1 // pred_fallthru
      _
    %250 = vsyncpa [#allocation3], 1
    %251 = vsyncpa [#allocation5], 1

</llo_original>
